<compile_context>
chip_gen: v5e
topology: v5e:2x2
jax: 0.10.0
libtpu: 0.0.40
codegen_flags: <defaults>
</compile_context>

<pallas_src>
import functools

import jax
import jax.numpy as jnp
from jax.experimental import pallas as pl
from jax.experimental.pallas import tpu as pltpu

_LANE = 128


def channels_norm_kernel(x_ref, a_ref, b_ref, o_ref, *, eps, n_channels):
    # x_ref: (Nb, C, T) tile; reduction over C (axis=1) stays inside the block.
    x = x_ref[...].astype(jnp.float32)
    mu = jnp.mean(x, axis=1, keepdims=True)                         # (Nb, 1, T)
    diff = x - mu
    # torch.std default is unbiased (ddof=1): divide by (C - 1).
    var = jnp.sum(diff * diff, axis=1, keepdims=True) * (1.0 / (n_channels - 1))
    sigma = jnp.sqrt(var)
    # Divide hoisted onto the (Nb, 1, T) vector (1/C of the elements); flip to
    # approx=True (EUP vrcp) if the VPU ever becomes the binding slot.
    inv = pl.reciprocal(sigma + eps)
    out = diff * inv                                                # plain VPU mul over (C, T)
    # (1, C, 1) params broadcast along batch + lanes in-register; no
    # wrapper-side (1, C, tile_hw) materialization.
    out = out * a_ref[...].astype(jnp.float32) + b_ref[...].astype(jnp.float32)
    o_ref[...] = out.astype(o_ref.dtype)


def _vmem_limit_bytes():
    """Per-generation VMEM limit (v5e/v6e: 128 MiB physical, v7x: 64 MiB)."""
    try:
        cap = int(pltpu.get_tpu_info().vmem_capacity_bytes)
    except Exception:
        cap = 64 << 20  # smallest per-TC VMEM across supported generations (v7x)
    return max(32 << 20, (cap * 3) // 4)


def _pick_lane_tile(HW, cap):
    """Largest multiple-of-128 lane tile <= cap; prefer one dividing HW
    (unmasked vst on every step) unless that forces a tile < cap/4."""
    cap = max(_LANE, (cap // _LANE) * _LANE)
    if HW % _LANE == 0:
        for cand in range(cap, _LANE - 1, -_LANE):
            if HW % cand == 0:
                if 4 * cand >= cap:
                    return cand
                break
    return cap  # masked partial last tile (Pallas masks the writeback)


def _choose_tiling(N, C, HW, itemsize, vmem_budget_bytes,
                   target_block_bytes, min_steps=2):
    """Pick (block_n, tile_hw) for x/out blocks of shape (block_n, C, tile_hw)."""
    # VMEM cost per lane column of one grid step (block_n = 1):
    #   double-buffered x-in + out blocks : 4 * C * itemsize
    #   in-kernel f32 temporaries (x, diff, result) : ~3 * C * 4
    per_lane = 4 * C * itemsize + 12 * C
    budget = int(vmem_budget_bytes * 0.8)            # headroom for params/sems
    max_lanes = max(_LANE, budget // per_lane)
    want_lanes = max(_LANE, target_block_bytes // (C * itemsize))
    lanes_cap = min(max_lanes, want_lanes)

    if HW > lanes_cap:
        # Spatial axis must be tiled.
        return 1, _pick_lane_tile(HW, lanes_cap)

    if N < min_steps:
        # Single image: split HW so the grid still has >= min_steps steps for
        # v7x's two TensorCores (only when it splits into 128-lane multiples;
        # otherwise keep the full extent in one step).
        if HW % _LANE == 0 and HW // _LANE >= min_steps:
            return 1, _pick_lane_tile(HW, HW // min_steps)
        return 1, HW

    # Whole image(s) per step: pack several tiny images per block so the
    # ~0.35 us/grid-step overhead is amortized, keeping >= min_steps steps.
    block_n = 1
    if HW < lanes_cap:
        max_bn = min(N, max(1, lanes_cap // HW))
        for cand in range(max_bn, 0, -1):
            if N % cand == 0 and N // cand >= min(min_steps, N):
                block_n = cand
                break
    return block_n, HW


def channels_normalization(x, a_2, b_2, eps=0.001, target_block_bytes=2 << 20):
    """x: (N, C, H, W); a_2, b_2: (1, C, 1, 1). Returns (N, C, H, W).

    Keep x in its model dtype (bf16 / f32): the kernel streams HBM in that
    dtype and upcasts to f32 in-registers only.
    """
    N, C, H, W = x.shape
    # Unbiased std (ddof=1) matches torch.std; needs C >= 2 to avoid div-by-zero.
    assert C >= 2, "ChannelsNormalization with torch.std semantics requires n_channels >= 2"
    HW = H * W

    vmem_limit = _vmem_limit_bytes()
    block_n, tile_hw = _choose_tiling(
        N, C, HW, x.dtype.itemsize, vmem_limit, target_block_bytes)
    grid = (N // block_n, pl.cdiv(HW, tile_hw))

    x_flat = x.reshape(N, C, HW)
    a_flat = a_2.reshape(1, C, 1)     # no wrapper-side lane broadcast
    b_flat = b_2.reshape(1, C, 1)

    kernel = functools.partial(channels_norm_kernel, eps=eps, n_channels=C)

    out_flat = pl.pallas_call(
        kernel,
        out_shape=jax.ShapeDtypeStruct((N, C, HW), x.dtype),
        grid_spec=pltpu.PrefetchScalarGridSpec(
            num_scalar_prefetch=0,
            grid=grid,
            in_specs=[
                pl.BlockSpec((block_n, C, tile_hw), lambda n, t: (n, 0, t)),
                pl.BlockSpec((1, C, 1), lambda n, t: (0, 0, 0)),
                pl.BlockSpec((1, C, 1), lambda n, t: (0, 0, 0)),
            ],
            out_specs=pl.BlockSpec((block_n, C, tile_hw), lambda n, t: (n, 0, t)),
        ),
        compiler_params=pltpu.CompilerParams(
            dimension_semantics=("parallel", "parallel"),
            vmem_limit_bytes=vmem_limit),
    )(x_flat, a_flat, b_flat)

    return out_flat.reshape(N, C, H, W)


def channels_normalization_ref(x, a_2, b_2, eps=0.001):
    mu = jnp.mean(x, axis=1, keepdims=True)
    sigma = jnp.std(x, axis=1, keepdims=True, ddof=1)  # torch.std unbiased
    ln_out = (x - mu) / (sigma + eps)
    return ln_out * a_2 + b_2


if __name__ == "__main__":
    key = jax.random.PRNGKey(0)

    # Small shape consistent with the module: batch=2, channels=4, spatial=16.
    N, C, H, W = 2, 4, 16, 16
    x = jax.random.normal(key, (N, C, H, W), dtype=jnp.float32)
    a_2 = jnp.ones((1, C, 1, 1), dtype=jnp.float32)   # nn.Parameter init: ones
    b_2 = jnp.zeros((1, C, 1, 1), dtype=jnp.float32)  # nn.Parameter init: zeros

    out = jax.block_until_ready(channels_normalization(x, a_2, b_2, eps=0.001))
    ref = channels_normalization_ref(x, a_2, b_2, eps=0.001)
    assert out.shape == (N, C, H, W)
    assert jnp.allclose(out, ref, atol=1e-5, rtol=1e-5), "mismatch vs reference"

    # Multi-image block path (block_n > 1): four tiny images pack two per step.
    x3 = jax.random.normal(jax.random.PRNGKey(2), (4, 4, 8, 8), dtype=jnp.float32)
    a3 = jax.random.normal(jax.random.PRNGKey(3), (1, 4, 1, 1), dtype=jnp.float32)
    b3 = jax.random.normal(jax.random.PRNGKey(4), (1, 4, 1, 1), dtype=jnp.float32)
    out3 = jax.block_until_ready(channels_normalization(x3, a3, b3, eps=0.001))
    ref3 = channels_normalization_ref(x3, a3, b3, eps=0.001)
    assert jnp.allclose(out3, ref3, atol=1e-5, rtol=1e-5), "mismatch (block_n > 1 path)"

    # Single image with HW % 128 == 0: the lane axis splits into >= 2 tiles so
    # both v7x TensorCores get work.
    x4 = jax.random.normal(jax.random.PRNGKey(5), (1, 8, 48, 48), dtype=jnp.float32)
    a4 = jnp.ones((1, 8, 1, 1), dtype=jnp.float32)
    b4 = jnp.zeros((1, 8, 1, 1), dtype=jnp.float32)
    out4 = jax.block_until_ready(channels_normalization(x4, a4, b4, eps=0.001))
    ref4 = channels_normalization_ref(x4, a4, b4, eps=0.001)
    assert jnp.allclose(out4, ref4, atol=1e-5, rtol=1e-5), "mismatch (split-HW path)"

    # Forced-small tiles with HW % 128 != 0: exercises the masked partial last
    # lane tile.
    x5 = jax.random.normal(jax.random.PRNGKey(6), (2, 4, 10, 25), dtype=jnp.float32)
    a5 = jnp.ones((1, 4, 1, 1), dtype=jnp.float32)
    b5 = jnp.zeros((1, 4, 1, 1), dtype=jnp.float32)
    out5 = jax.block_until_ready(
        channels_normalization(x5, a5, b5, eps=0.001, target_block_bytes=1024))
    ref5 = channels_normalization_ref(x5, a5, b5, eps=0.001)
    assert jnp.allclose(out5, ref5, atol=1e-5, rtol=1e-5), "mismatch (masked tail path)"

    # bf16 HBM stream (upcast to f32 only in-registers inside the kernel).
    x6 = jax.random.normal(jax.random.PRNGKey(7), (2, 4, 16, 16), dtype=jnp.bfloat16)
    out6 = jax.block_until_ready(channels_normalization(x6, a_2, b_2, eps=0.001))
    ref6 = channels_normalization_ref(x6.astype(jnp.float32), a_2, b_2, eps=0.001)
    assert out6.dtype == jnp.bfloat16
    assert jnp.allclose(out6.astype(jnp.float32), ref6, atol=2e-2, rtol=2e-2), \
        "mismatch (bf16 path)"

    print("KERNEL_OK")
</pallas_src>

<mosaic_0001>
module attributes {stable_mosaic.version = 11 : i64} {
  func.func @channels_norm_kernel(%arg0: i32, %arg1: i32, %arg2: memref<1x4x256xf32, #tpu.memory_space<vmem>>, %arg3: memref<1x4x1xf32, #tpu.memory_space<vmem>>, %arg4: memref<1x4x1xf32, #tpu.memory_space<vmem>>, %arg5: memref<1x4x256xf32, #tpu.memory_space<vmem>>) attributes {dimension_semantics = [#tpu.dimension_semantics<parallel>, #tpu.dimension_semantics<parallel>], iteration_bounds = array<i64: 2, 1>, scalar_prefetch = 0 : i64, scratch_operands = 0 : i64, tpu.core_type = #tpu.core_type<tc>, window_params = [{transform_indices = @transform_0, window_bounds = array<i64: 1, 4, 256>}, {pipeline_mode = #tpu.pipeline_mode<synchronous>, transform_indices = @transform_1, window_bounds = array<i64: 1, 4, 1>}, {pipeline_mode = #tpu.pipeline_mode<synchronous>, transform_indices = @transform_2, window_bounds = array<i64: 1, 4, 1>}, {transform_indices = @transform_3, window_bounds = array<i64: 1, 4, 256>}]} {
    %c0 = arith.constant 0 : index
    %c0_0 = arith.constant 0 : index
    %c0_1 = arith.constant 0 : index
    %0 = vector.load %arg2[%c0, %c0_0, %c0_1] : memref<1x4x256xf32, #tpu.memory_space<vmem>>, vector<1x4x256xf32>
    %cst = arith.constant dense<0.000000e+00> : vector<1x256xf32>
    %1 = vector.multi_reduction <add>, %0, %cst [1] : vector<1x4x256xf32> to vector<1x256xf32>
    %2 = vector.shape_cast %1 : vector<1x256xf32> to vector<1x1x256xf32>
    %cst_2 = arith.constant 4.000000e+00 : f32
    %3 = vector.broadcast %cst_2 : f32 to vector<1x1x256xf32>
    %4 = arith.divf %2, %3 : vector<1x1x256xf32>
    %5 = vector.broadcast %4 : vector<1x1x256xf32> to vector<1x4x256xf32>
    %6 = arith.subf %0, %5 : vector<1x4x256xf32>
    %7 = arith.mulf %6, %6 : vector<1x4x256xf32>
    %cst_3 = arith.constant dense<0.000000e+00> : vector<1x256xf32>
    %8 = vector.multi_reduction <add>, %7, %cst_3 [1] : vector<1x4x256xf32> to vector<1x256xf32>
    %9 = vector.shape_cast %8 : vector<1x256xf32> to vector<1x1x256xf32>
    %cst_4 = arith.constant 0.333333343 : f32
    %10 = vector.broadcast %cst_4 : f32 to vector<1x1x256xf32>
    %11 = arith.mulf %9, %10 : vector<1x1x256xf32>
    %12 = math.sqrt %11 : vector<1x1x256xf32>
    %cst_5 = arith.constant 1.000000e-03 : f32
    %13 = vector.broadcast %cst_5 : f32 to vector<1x1x256xf32>
    %14 = arith.addf %12, %13 : vector<1x1x256xf32>
    %15 = tpu.reciprocal %14 : vector<1x1x256xf32> -> vector<1x1x256xf32>
    %16 = vector.broadcast %15 : vector<1x1x256xf32> to vector<1x4x256xf32>
    %17 = arith.mulf %6, %16 : vector<1x4x256xf32>
    %c0_6 = arith.constant 0 : index
    %c0_7 = arith.constant 0 : index
    %c0_8 = arith.constant 0 : index
    %18 = vector.load %arg3[%c0_6, %c0_7, %c0_8] : memref<1x4x1xf32, #tpu.memory_space<vmem>>, vector<1x4x1xf32>
    %19 = vector.broadcast %18 : vector<1x4x1xf32> to vector<1x4x256xf32>
    %20 = arith.mulf %17, %19 : vector<1x4x256xf32>
    %c0_9 = arith.constant 0 : index
    %c0_10 = arith.constant 0 : index
    %c0_11 = arith.constant 0 : index
    %21 = vector.load %arg4[%c0_9, %c0_10, %c0_11] : memref<1x4x1xf32, #tpu.memory_space<vmem>>, vector<1x4x1xf32>
    %22 = vector.broadcast %21 : vector<1x4x1xf32> to vector<1x4x256xf32>
    %23 = arith.addf %20, %22 : vector<1x4x256xf32>
    %c0_12 = arith.constant 0 : index
    %c0_13 = arith.constant 0 : index
    %c0_14 = arith.constant 0 : index
    %24 = vector.load %arg5[%c0_12, %c0_13, %c0_14] : memref<1x4x256xf32, #tpu.memory_space<vmem>>, vector<1x4x256xf32>
    tpu.vector_store %arg5[%c0_12, %c0_13, %c0_14], %23 {strides = array<i32>} : memref<1x4x256xf32, #tpu.memory_space<vmem>>, vector<1x4x256xf32>,
    return
  }
  func.func @transform_0(%arg0: i32, %arg1: i32) -> (i32, i32, i32) {
    %c0_i32 = arith.constant 0 : i32
    %c0_i32_0 = arith.constant 0 : i32
    return %arg0, %c0_i32, %arg1 : i32, i32, i32
  }
  func.func @transform_1(%arg0: i32, %arg1: i32) -> (i32, i32, i32) {
    %c0_i32 = arith.constant 0 : i32
    %c0_i32_0 = arith.constant 0 : i32
    %c0_i32_1 = arith.constant 0 : i32
    %c0_i32_2 = arith.constant 0 : i32
    return %c0_i32, %c0_i32_0, %c0_i32_1 : i32, i32, i32
  }
  func.func @transform_2(%arg0: i32, %arg1: i32) -> (i32, i32, i32) {
    %c0_i32 = arith.constant 0 : i32
    %c0_i32_0 = arith.constant 0 : i32
    %c0_i32_1 = arith.constant 0 : i32
    %c0_i32_2 = arith.constant 0 : i32
    return %c0_i32, %c0_i32_0, %c0_i32_1 : i32, i32, i32
  }
  func.func @transform_3(%arg0: i32, %arg1: i32) -> (i32, i32, i32) {
    %c0_i32 = arith.constant 0 : i32
    %c0_i32_0 = arith.constant 0 : i32
    return %arg0, %c0_i32, %arg1 : i32, i32, i32
  }
}

</mosaic_0001>

<llo_original>
// kernel: tpu_custom_call.1
$region0: #{tpu_custom_call.1}
  #allocation0 [shape = 'u32[]', space=smem, size = 0x4, offset = 0x4, fixed_abs, tag = 'smem constant byte address 0x4 - core index']
  #allocation1 [shape = 'u32[72,128]{1,0:T(1,128)}', space=vmem, size = 0x9000, scoped, tag = 'internal scratch']
  %s0 = inlined_call_operand.hbm [shape: f32[2,4,256], index: 0, kind: input, shape index: {}]
  %s1 = inlined_call_operand.vmem [shape: f32[1,4,1], index: 1, kind: input, shape index: {}]
  %s2 = inlined_call_operand.vmem [shape: f32[1,4,1], index: 2, kind: input, shape index: {}]
  %s3 = inlined_call_operand.hbm [shape: f32[2,4,256], index: 3, kind: output, shape index: {}]
  %s4 = sld [smem:[#allocation0]]
  $region49: #{tpu_custom_call.1} parent=0
    _
  %s6 = ssub.s32 1, %s4
  %s7 = scalar_select 0, %s6, %s4
  $region1: #{tpu_custom_call.1} parent=0
    #allocation2 [shape = 'u8[8192]{0}', space=vmem, size = 0x2000, scoped, tag = 'input window, operand 0']
    #allocation3 [shape = 's32[2]{0}', space=sflag, size = 0x8, scoped, tag = 'scoped memory for tpu_custom_call.1']
    #allocation4 [shape = 's32[2]{0}', space=sflag, size = 0x8, scoped, tag = 'scoped memory for tpu_custom_call.1']
    #allocation5 [shape = 'u8[8192]{0}', space=vmem, size = 0x2000, scoped, tag = 'output window, operand 0']
    %8 = vsyncpa [#allocation3], 0
    %s9 = scalar_lea.sflag [#allocation3], 1
    %10 = vsyncpa %s9, 0
    %11 = vsyncpa [#allocation4], 0
    %s12 = scalar_lea.sflag [#allocation4], 1
    %13 = vsyncpa %s12, 0
    loop: start=0, step=1, limit=4
    $region2: #{tpu_custom_call.1} parent=1 // loop_pre_header
      _
    $region3: #{tpu_custom_call.1} parent=1 // loop_header
      %s15 = sphi 0, %s19
      %p16 = scmp.ge.s32.totalorder %s15, 4
      %s22 = sphi 0, %s34
      %s23 = sphi 0, %s30
      %s24 = sphi 0, %s22
      %s25 = sphi 0, %s23
      %s26 = sphi 0, %s24
      %s27 = sphi 0, %s25
      %s39 = sphi 0, %s41
      %s42 = sphi 0, %s39
      %s43 = sphi 0, %s42
      %s59 = sphi 0, %s43
      %s63 = sphi 0, %s63
      %s65 = sphi 0, %s63
      %s66 = sphi 0, %s65
      %s80 = sphi 0, %s66
      %s84 = sphi 0, %s84
      %s86 = sphi 0, %s84
      %s87 = sphi 0, %s86
      %s101 = sphi 0, %s87
      %s109 = sphi 0, %s111
      %s112 = sphi 0, %s109
      %s113 = sphi 0, %s112
      %s129 = sphi 0, %s113
    $region4: #{tpu_custom_call.1} parent=1 // loop_header_branch
      %18 = sbr.rel (%p16) target = $region8
    $region5: #{tpu_custom_call.1} parent=1 // loop_body
      %s20 = ssub.s32 %s15, 1
      %s21 = ssub.s32 %s15, 2
      %s28 = sadd.s32 1, %s23
      %p29 = scmp.ge.s32.totalorder %s28, 1
      %s30 = scalar_select %p29, 0, %s28
      %s31 = sadd.s32 1, %s22
      %s32 = scalar_select %p29, %s31, %s22
      %p33 = scmp.ge.s32.totalorder %s32, 2
      %s34 = scalar_select %p33, 0, %s32
      %s35 = ssub.s32 %s22, %s34
      %s36 = ssub.s32 %s23, %s30
      %s37 = sor.u32 %s35, %s36
      %p38 = scmp.eq.s32.totalorder %s37, 0
      %s40 = sadd.s32 %s39, 1
      %s41 = scalar_select %p38, %s39, %s40
      %p44 = pneg %p38
      %p45 = scmp.eq.s32.totalorder %s15, 1
      %p46 = por %p44, %p45
      %p47 = scmp.ne.s32.totalorder %s39, %s42
      %p48 = scmp.eq.s32.totalorder %s15, 0
      %p49 = por %p47, %p48
      %p50 = scmp.ne.s32.totalorder %s39, %s42
      %p51 = scmp.eq.s32.totalorder %s20, 1
      %p52 = por %p50, %p51
      %p53 = scmp.ne.s32.totalorder %s42, %s43
      %p54 = scmp.eq.s32.totalorder %s20, 0
      %p55 = por %p53, %p54
      %p56 = scmp.ne.s32.totalorder %s42, %s43
      %p57 = scmp.eq.s32.totalorder %s21, 1
      %p58 = por %p56, %p57
      %p60 = scmp.ne.s32.totalorder %s43, %s59
      %p61 = scmp.eq.s32.totalorder %s21, 0
      %p62 = por %p60, %p61
      %s64 = sadd.s32 %s63, 1
      %p67 = scmp.eq.s32.totalorder %s15, 1
      %p68 = scmp.ne.s32.totalorder %s63, %s65
      %p69 = scmp.eq.s32.totalorder %s15, 0
      %p70 = por %p68, %p69
      %p71 = scmp.ne.s32.totalorder %s63, %s65
      %p72 = scmp.eq.s32.totalorder %s20, 1
      %p73 = por %p71, %p72
      %p74 = scmp.ne.s32.totalorder %s65, %s66
      %p75 = scmp.eq.s32.totalorder %s20, 0
      %p76 = por %p74, %p75
      %p77 = scmp.ne.s32.totalorder %s65, %s66
      %p78 = scmp.eq.s32.totalorder %s21, 1
      %p79 = por %p77, %p78
      %p81 = scmp.ne.s32.totalorder %s66, %s80
      %p82 = scmp.eq.s32.totalorder %s21, 0
      %p83 = por %p81, %p82
      %s85 = sadd.s32 %s84, 1
      %p88 = scmp.eq.s32.totalorder %s15, 1
      %p89 = scmp.ne.s32.totalorder %s84, %s86
      %p90 = scmp.eq.s32.totalorder %s15, 0
      %p91 = por %p89, %p90
      %p92 = scmp.ne.s32.totalorder %s84, %s86
      %p93 = scmp.eq.s32.totalorder %s20, 1
      %p94 = por %p92, %p93
      %p95 = scmp.ne.s32.totalorder %s86, %s87
      %p96 = scmp.eq.s32.totalorder %s20, 0
      %p97 = por %p95, %p96
      %p98 = scmp.ne.s32.totalorder %s86, %s87
      %p99 = scmp.eq.s32.totalorder %s21, 1
      %p100 = por %p98, %p99
      %p102 = scmp.ne.s32.totalorder %s87, %s101
      %p103 = scmp.eq.s32.totalorder %s21, 0
      %p104 = por %p102, %p103
      %s105 = ssub.s32 %s22, %s34
      %s106 = ssub.s32 %s23, %s30
      %s107 = sor.u32 %s105, %s106
      %p108 = scmp.eq.s32.totalorder %s107, 0
      %s110 = sadd.s32 %s109, 1
      %s111 = scalar_select %p108, %s109, %s110
      %p114 = pneg %p108
      %p115 = scmp.eq.s32.totalorder %s15, 1
      %p116 = por %p114, %p115
      %p117 = scmp.ne.s32.totalorder %s109, %s112
      %p118 = scmp.eq.s32.totalorder %s15, 0
      %p119 = por %p117, %p118
      %p120 = scmp.ne.s32.totalorder %s109, %s112
      %p121 = scmp.eq.s32.totalorder %s20, 1
      %p122 = por %p120, %p121
      %p123 = scmp.ne.s32.totalorder %s112, %s113
      %p124 = scmp.eq.s32.totalorder %s20, 0
      %p125 = por %p123, %p124
      %p126 = scmp.ne.s32.totalorder %s112, %s113
      %p127 = scmp.eq.s32.totalorder %s21, 1
      %p128 = por %p126, %p127
      %p130 = scmp.ne.s32.totalorder %s113, %s129
      %p131 = scmp.eq.s32.totalorder %s21, 0
      %p132 = por %p130, %p131
      %p133 = scmp.le.s32.totalorder 1, %s15
      %p134 = scmp.lt.s32.totalorder %s15, 3
      %p135 = pnand %p133, %p134
      %p136 = pneg %p135
      // Predicated region
      $region9: #{tpu_custom_call.1} parent=5 // pred_check
        _
      $region10: #{tpu_custom_call.1} parent=5 // pred_check_branch
        %138 = sbr.rel (%p135) target = $region12
      $region11: #{tpu_custom_call.1} parent=5 // pred_region
        %s139 = ssub.s32 %s15, 1
        // Predicated region
        $region13: #{tpu_custom_call.1} parent=11 // pred_check
          %p140 = pneg %p76
        $region14: #{tpu_custom_call.1} parent=11 // pred_check_branch
          %142 = sbr.rel (%p140) target = $region16
        $region15: #{tpu_custom_call.1} parent=11 // pred_region
          _
        $region16: #{tpu_custom_call.1} parent=11 // pred_fallthru
          _
        // Predicated region
        $region17: #{tpu_custom_call.1} parent=11 // pred_check
          %p143 = pneg %p97
        $region18: #{tpu_custom_call.1} parent=11 // pred_check_branch
          %145 = sbr.rel (%p143) target = $region20
        $region19: #{tpu_custom_call.1} parent=11 // pred_region
          _
        $region20: #{tpu_custom_call.1} parent=11 // pred_fallthru
          _
      $region12: #{tpu_custom_call.1} parent=5 // pred_fallthru
        _
      %p146 = scmp.lt.s32.totalorder %s15, 2
      // Predicated region
      $region21: #{tpu_custom_call.1} parent=5 // pred_check
        %p147 = pneg %p146
      $region22: #{tpu_custom_call.1} parent=5 // pred_check_branch
        %149 = sbr.rel (%p147) target = $region24
      $region23: #{tpu_custom_call.1} parent=5 // pred_region
        // Predicated region
        $region25: #{tpu_custom_call.1} parent=23 // pred_check
          %p150 = pneg %p49
        $region26: #{tpu_custom_call.1} parent=23 // pred_check_branch
          %152 = sbr.rel (%p150) target = $region28
        $region27: #{tpu_custom_call.1} parent=23 // pred_region
          %s153 = sand.u32 %s39, 1
          %s154 = scalar_lea.sflag [#allocation3], %s153
          %s155 = sand.u32 %s39, 1
          %s156 = smul.addr %s155, 8
          %s157 = scalar_lea.vmem [#allocation2], %s156
          %s158 = smul.u32 2, %s23
          %160 = vsyncadd %s154, 0
          %s161 = smul.addr %s22, 2
          %s162 = sadd.s32 %s158, %s161
          %s163 = smul.addr %s162, 4
          %s164 = scalar_lea.hbm %s0, %s163
          %s166 = sshll.u32 %s164, 4
          %s167 = int_to_ptr.hbm [resolvable:$true] %s166
          %s168 = sshll.u32 %s157, 4
          %s169 = int_to_ptr.vmem [resolvable:$true] %s168
          %171 = dma.hbm_to_vmem [thread:$0]  %s167, 128, %s169, %s154
        $region28: #{tpu_custom_call.1} parent=23 // pred_fallthru
          _
      $region24: #{tpu_custom_call.1} parent=5 // pred_fallthru
        _
      %p172 = scmp.le.s32.totalorder 1, %s15
      %p173 = scmp.lt.s32.totalorder %s15, 3
      %p174 = pnand %p172, %p173
      %p175 = pneg %p174
      // Predicated region
      $region29: #{tpu_custom_call.1} parent=5 // pred_check
        _
      $region30: #{tpu_custom_call.1} parent=5 // pred_check_branch
        %177 = sbr.rel (%p174) target = $region32
      $region31: #{tpu_custom_call.1} parent=5 // pred_region
        %s178 = ssub.s32 %s15, 1
        %s179 = sand.u32 %s42, 1
        %s180 = scalar_lea.sflag [#allocation3], %s179
        %s181 = sand.u32 %s42, 1
        %s182 = smul.addr %s181, 8
        %s183 = scalar_lea.vmem [#allocation2], %s182
        // Predicated region
        $region33: #{tpu_custom_call.1} parent=31 // pred_check
          %p184 = pneg %p55
        $region34: #{tpu_custom_call.1} parent=31 // pred_check_branch
          %186 = sbr.rel (%p184) target = $region36
        $region35: #{tpu_custom_call.1} parent=31 // pred_region
          %188 = dma.done %s180, 128
        $region36: #{tpu_custom_call.1} parent=31 // pred_fallthru
          _
        %s189 = sand.u32 %s42, 1
        %s190 = scalar_lea.sflag [#allocation3], %s189
        %s191 = sand.u32 %s42, 1
        %s192 = smul.addr %s191, 8
        %s193 = scalar_lea.vmem [#allocation2], %s192
        %p194 = pneg %p55
        %p195 = pneg %p52
        %p196 = pneg %p76
        %p197 = pneg %p73
        %p198 = pneg %p97
        %p199 = pneg %p94
        %p200 = pneg %p125
        %p201 = pneg %p122
        %s202 = sand.u32 %s112, 1
        %s203 = scalar_lea.sflag [#allocation4], %s202
        %s204 = sand.u32 %s112, 1
        %s205 = smul.addr %s204, 8
        %s206 = scalar_lea.vmem [#allocation5], %s205
        %s207 = smul.u32 2, %s25
        %s208 = smul.u32 2, %s25
        %v209 = vld [vmem:[%s183] sm:$0xff]
        %211 = vst [vmem:[#allocation1] ss:$2 sm:$0xff] %v209
        %v212 = vld.sshfl [vmem:[#allocation1] sm:$0xff pattern:$0x75316420]
        %v213 = vld.sshfl [vmem:[#allocation1 + $0x8] sm:$0xff pattern:$0x75316420]
        %vm216 = vcmask 1043456
        %v217 = vsel %vm216, %v212, 0.0
        %v218 = vrot.slane %v217, 4
        %v219 = vadd.f32 %v217, %v218
        %v220 = vrot.slane %v219, 2
        %v221 = vadd.f32 %v219, %v220
        %v222 = vrot.slane %v221, 1
        %v223 = vadd.f32 %v221, %v222
        %v224 = vsel %vm216, %v213, 0.0
        %v225 = vrot.slane %v224, 4
        %v226 = vadd.f32 %v224, %v225
        %v227 = vrot.slane %v226, 2
        %v228 = vadd.f32 %v226, %v227
        %v229 = vrot.slane %v228, 1
        %v230 = vadd.f32 %v228, %v229
        %v231 = vrcp.pop 4.0
        %v232 = vmul.f32 4.0, %v231
        %v233 = vsub.f32 1.0, %v232
        %v234 = vmul.f32 %v231, %v233
        %v235 = vadd.f32 %v231, %v234
        %vm236 = vweird.f32 %v231
        %v237 = vsel %vm236, %v231, %v235
        %v238 = vmul.f32 %v223, %v237
        %v239 = vmul.f32 %v230, %v237
        %v242 = vrot.slane %v239, 4
        %v243 = vsel %vm216, %v238, %v242
        %v245 = vsub.f32 %v209, %v243
        %v246 = vmul.f32 %v245, %v245
        %248 = vst [vmem:[#allocation1] ss:$2 sm:$0xff] %v246
        %v249 = vld.sshfl [vmem:[#allocation1] sm:$0xff pattern:$0x75316420]
        %v250 = vld.sshfl [vmem:[#allocation1 + $0x8] sm:$0xff pattern:$0x75316420]
        %v253 = vsel %vm216, %v249, 0.0
        %v254 = vrot.slane %v253, 4
        %v255 = vadd.f32 %v253, %v254
        %v256 = vrot.slane %v255, 2
        %v257 = vadd.f32 %v255, %v256
        %v258 = vrot.slane %v257, 1
        %v259 = vadd.f32 %v257, %v258
        %v260 = vsel %vm216, %v250, 0.0
        %v261 = vrot.slane %v260, 4
        %v262 = vadd.f32 %v260, %v261
        %v263 = vrot.slane %v262, 2
        %v264 = vadd.f32 %v262, %v263
        %v265 = vrot.slane %v264, 1
        %v266 = vadd.f32 %v264, %v265
        %v267 = vmul.f32 %v259, 0.33333334
        %v268 = vmul.f32 %v266, 0.33333334
        %v269 = vrsqrt.pop %v267
        %v270 = vmul.f32 %v269, %v267
        %v271 = vmul.f32 %v270, %v269
        %v272 = vmul.f32 0.5, %v271
        %v273 = vsub.f32 1.5, %v272
        %v274 = vmul.f32 %v269, %v273
        %v275 = vmul.f32 %v267, %v274
        %vm276 = vcmp.eq.f32.partialorder %v267, inf
        %v277 = vsel %vm276, %v267, %v275
        %vm278 = vcmp.eq.f32.partialorder %v267, 0.0
        %v279 = vand.u32 %v267, 2147483648
        %v280 = vsel %vm278, %v279, %v277
        %v281 = vrsqrt.pop %v268
        %v282 = vmul.f32 %v281, %v268
        %v283 = vmul.f32 %v282, %v281
        %v284 = vmul.f32 0.5, %v283
        %v285 = vsub.f32 1.5, %v284
        %v286 = vmul.f32 %v281, %v285
        %v287 = vmul.f32 %v268, %v286
        %vm288 = vcmp.eq.f32.partialorder %v268, inf
        %v289 = vsel %vm288, %v268, %v287
        %vm290 = vcmp.eq.f32.partialorder %v268, 0.0
        %v291 = vand.u32 %v268, 2147483648
        %v292 = vsel %vm290, %v291, %v289
        %v293 = vadd.f32 %v280, 0.001
        %v294 = vadd.f32 %v292, 0.001
        %v295 = vrcp.pop %v293
        %v296 = vmul.f32 %v293, %v295
        %v297 = vsub.f32 1.0, %v296
        %v298 = vmul.f32 %v295, %v297
        %v299 = vadd.f32 %v295, %v298
        %vm300 = vweird.f32 %v293
        %vm301 = vweird.f32 %v295
        %vm302 = vmor %vm300, %vm301
        %v303 = vsel %vm302, %v295, %v299
        %v304 = vand.u32 2147483647, %v293
        %vm305 = vcmp.eq.f32.partialorder %v304, 8.507059e+37
        %v306 = vand.u32 %v293, 2147483648
        %v307 = vor.u32 1.1754944e-38, %v306
        %v308 = vsel %vm305, %v307, %v303
        %v309 = vrcp.pop %v294
        %v310 = vmul.f32 %v294, %v309
        %v311 = vsub.f32 1.0, %v310
        %v312 = vmul.f32 %v309, %v311
        %v313 = vadd.f32 %v309, %v312
        %vm314 = vweird.f32 %v294
        %vm315 = vweird.f32 %v309
        %vm316 = vmor %vm314, %vm315
        %v317 = vsel %vm316, %v309, %v313
        %v318 = vand.u32 2147483647, %v294
        %vm319 = vcmp.eq.f32.partialorder %v318, 8.507059e+37
        %v320 = vand.u32 %v294, 2147483648
        %v321 = vor.u32 1.1754944e-38, %v320
        %v322 = vsel %vm319, %v321, %v317
        %v325 = vrot.slane %v322, 4
        %v326 = vsel %vm216, %v308, %v325
        %v328 = vmul.f32 %v245, %v326
        %v329 = vld [vmem:[%s1] sm:$0xf]
        %331 = vset.pattern.permute.xlu0 0
        %332 = vperm.xlu0 %331, %v329
        %v333 = vpop.permute.xlu0 %332
        %v335 = vunpack.c.l.s4 839922192
        %v336 = vunpack.c.0.s8 %v335
        %v337 = vperm.slane %v333, %v336
        %v339 = vmul.f32 %v328, %v337
        %v340 = vld [vmem:[%s2] sm:$0xf]
        %342 = vset.pattern.permute.xlu0 0
        %343 = vperm.xlu0 %342, %v340
        %v344 = vpop.permute.xlu0 %343
        %v346 = vunpack.c.l.s4 839922192
        %v347 = vunpack.c.0.s8 %v346
        %v348 = vperm.slane %v344, %v347
        %v350 = vadd.f32 %v339, %v348
        %351 = vst [vmem:[%s206] sm:$0xff] %v350
        %s352 = sand.u32 %s112, 1
        %s353 = scalar_lea.sflag [#allocation4], %s352
        %s354 = sand.u32 %s112, 1
        %s355 = smul.addr %s354, 8
        %s356 = scalar_lea.vmem [#allocation5], %s355
        // Predicated region
        $region37: #{tpu_custom_call.1} parent=31 // pred_check
          %p357 = pneg %p122
        $region38: #{tpu_custom_call.1} parent=31 // pred_check_branch
          %359 = sbr.rel (%p357) target = $region40
        $region39: #{tpu_custom_call.1} parent=31 // pred_region
          %s360 = smul.u32 2, %s25
          %362 = vsyncadd %s353, 0
          %s363 = smul.addr %s24, 2
          %s364 = sadd.s32 %s360, %s363
          %s365 = smul.addr %s364, 4
          %s366 = scalar_lea.hbm %s3, %s365
          %s368 = sshll.u32 %s356, 4
          %s369 = int_to_ptr.vmem [resolvable:$true] %s368
          %s370 = sshll.u32 %s366, 4
          %s371 = int_to_ptr.hbm [resolvable:$true] %s370
          %373 = dma.vmem_to_hbm [thread:$0]  %s369, 128, %s371, %s353
        $region40: #{tpu_custom_call.1} parent=31 // pred_fallthru
          _
      $region32: #{tpu_custom_call.1} parent=5 // pred_fallthru
        _
      %p374 = scmp.le.s32.totalorder 2, %s15
      // Predicated region
      $region41: #{tpu_custom_call.1} parent=5 // pred_check
        %p375 = pneg %p374
      $region42: #{tpu_custom_call.1} parent=5 // pred_check_branch
        %377 = sbr.rel (%p375) target = $region44
      $region43: #{tpu_custom_call.1} parent=5 // pred_region
        %s378 = ssub.s32 %s15, 2
        // Predicated region
        $region45: #{tpu_custom_call.1} parent=43 // pred_check
          %p379 = pneg %p128
        $region46: #{tpu_custom_call.1} parent=43 // pred_check_branch
          %381 = sbr.rel (%p379) target = $region48
        $region47: #{tpu_custom_call.1} parent=43 // pred_region
          %s382 = sand.u32 %s113, 1
          %s383 = scalar_lea.sflag [#allocation4], %s382
          %s384 = sand.u32 %s113, 1
          %s385 = smul.addr %s384, 8
          %s386 = scalar_lea.vmem [#allocation5], %s385
          %388 = dma.done %s383, 128
        $region48: #{tpu_custom_call.1} parent=43 // pred_fallthru
          _
      $region44: #{tpu_custom_call.1} parent=5 // pred_fallthru
        _
    $region6: #{tpu_custom_call.1} parent=1 // loop_footer
      %s19 = sadd.s32 1, %s15
    $region7: #{tpu_custom_call.1} parent=1 // loop_footer_branch
      %14 = sbr.rel target = $region3
    $region8: #{tpu_custom_call.1} parent=1 // loop_exit
      _
    %389 = vsyncpa [#allocation3], 1
    %s390 = scalar_lea.sflag [#allocation3], 1
    %391 = vsyncpa %s390, 1
    %392 = vsyncpa [#allocation4], 1
    %s393 = scalar_lea.sflag [#allocation4], 1
    %394 = vsyncpa %s393, 1

</llo_original>
